<compile_context>
chip_gen: v5e
topology: v5e:2x2
jax: 0.10.0
libtpu: 0.0.40
codegen_flags: <defaults>
</compile_context>

<pallas_src>
import math
from functools import partial

import jax
import jax.numpy as jnp
from jax import lax
from jax.experimental import pallas as pl
from jax.experimental.pallas import tpu as pltpu

MASK_VALUE = -1e30  # large-negative additive mask (keeps online softmax NaN-free)


def _pick_tile(n, cap, align):
    """Largest tile <= cap that divides n (stepping by `align`); full n if small."""
    if n <= cap:
        return n
    t = (cap // align) * align
    while t >= align:
        if n % t == 0:
            return t
        t -= align
    return n  # TODO(synk): ragged-edge handling for awkward sizes


# -----------------------------------------------------------------------------
# Kernel 1: per-head input projection.  Writes head-major layouts directly,
# eliminating the XLA head-split transposes.
# -----------------------------------------------------------------------------
def _proj_heads_kernel(x_ref, w_ref, b_ref, o_ref):
    # x: (ts, Din)   w: (Din, Dh)   b: (1, Dh)   o: (ts, Dh)
    y = jnp.dot(x_ref[...], w_ref[...], preferred_element_type=jnp.float32)
    o_ref[...] = (y + b_ref[...]).astype(o_ref.dtype)


def _proj_heads_t_kernel(x_ref, w_ref, b_ref, o_ref):
    # K path: x: (ts, Din)   w: (Din, Dh)   b: (Dh, 1)   o: (Dh, ts)
    # Transposed feed happens once here instead of per flash step.
    y = lax.dot_general(w_ref[...], x_ref[...],
                        dimension_numbers=(((0,), (1,)), ((), ())),
                        preferred_element_type=jnp.float32)
    o_ref[...] = (y + b_ref[...]).astype(o_ref.dtype)


def pallas_head_proj(x, w_h, b_h, *, transpose_out=False):
    """Per-head linear projection.

    x:   [B, S, Din]
    w_h: [H, Din, Dh]   (head-stacked; any scale folding already applied)
    b_h: [H, 1, Dh]  (normal)  or  [H, Dh, 1]  (transpose_out)
    ->   [B, H, S, Dh]  (normal)  or  [B, H, Dh, S]  (transpose_out, for K)

    Grid (B, S_tiles, H) with the head axis innermost: the x tile's block index
    is constant across heads, so it is DMA'd from HBM only once per tile.
    TODO(synk): add a Din grid axis + f32 accumulator for very large Din.
    """
    B, S, Din = x.shape
    H, _, Dh = w_h.shape
    # Transposed output puts S on the lane axis -> multiple of 128 (or full S);
    # normal output puts S on the sublane axis -> multiple of 8 (or full S).
    ts = _pick_tile(S, 512, 128 if transpose_out else 8)
    grid = (B, S // ts, H)

    x_spec = pl.BlockSpec((None, ts, Din), lambda b, si, h: (b, si, 0))
    w_spec = pl.BlockSpec((None, Din, Dh), lambda b, si, h: (h, 0, 0))
    if transpose_out:
        kernel = _proj_heads_t_kernel
        b_spec = pl.BlockSpec((None, Dh, 1), lambda b, si, h: (h, 0, 0))
        out_shape = jax.ShapeDtypeStruct((B, H, Dh, S), x.dtype)
        out_spec = pl.BlockSpec((None, None, Dh, ts),
                                lambda b, si, h: (b, h, 0, si))
    else:
        kernel = _proj_heads_kernel
        b_spec = pl.BlockSpec((None, 1, Dh), lambda b, si, h: (h, 0, 0))
        out_shape = jax.ShapeDtypeStruct((B, H, S, Dh), x.dtype)
        out_spec = pl.BlockSpec((None, None, ts, Dh),
                                lambda b, si, h: (b, h, si, 0))

    return pl.pallas_call(
        kernel,
        out_shape=out_shape,
        grid_spec=pltpu.PrefetchScalarGridSpec(
            num_scalar_prefetch=0,
            grid=grid,
            in_specs=[x_spec, w_spec, b_spec],
            out_specs=out_spec,
        ),
        compiler_params=pltpu.CompilerParams(
            dimension_semantics=("parallel", "parallel", "parallel")),
    )(x, w_h, b_h)


# -----------------------------------------------------------------------------
# Kernel 2: output projection.  Contracts the head axis of ctx [B,nH,Sq,Dh]
# directly (grid head axis "arbitrary" + resident f32 accumulator), so the
# [B,nH,Sq,Dh] -> [B,Sq,D] merge transpose is never materialized in HBM.
# -----------------------------------------------------------------------------
def _out_proj_kernel(ctx_ref, wo_ref, bo_ref, o_ref, acc_ref):
    # ctx: (tq, Dh)   wo: (Dh, D)   bo: (1, D)   o: (tq, D)   acc: (tq, D) f32
    h = pl.program_id(2)

    @pl.when(h == 0)
    def _():
        acc_ref[...] = jnp.zeros(acc_ref.shape, dtype=acc_ref.dtype)

    acc_ref[...] += jnp.dot(ctx_ref[...], wo_ref[...],
                            preferred_element_type=jnp.float32)

    @pl.when(h == pl.num_programs(2) - 1)
    def _():
        o_ref[...] = (acc_ref[...] + bo_ref[...]).astype(o_ref.dtype)


def pallas_out_proj(ctx_h, wo_h, bo):
    """ctx_h: [B, nH, Sq, Dh], wo_h: [nH, Dh, D], bo: [1, D] -> [B, Sq, D]."""
    B, nH, Sq, Dh = ctx_h.shape
    D = wo_h.shape[2]
    tq = _pick_tile(Sq, 512, 8)
    grid = (B, Sq // tq, nH)
    return pl.pallas_call(
        _out_proj_kernel,
        out_shape=jax.ShapeDtypeStruct((B, Sq, D), ctx_h.dtype),
        grid_spec=pltpu.PrefetchScalarGridSpec(
            num_scalar_prefetch=0,
            grid=grid,
            in_specs=[
                pl.BlockSpec((None, None, tq, Dh), lambda b, si, h: (b, h, si, 0)),
                pl.BlockSpec((None, Dh, D), lambda b, si, h: (h, 0, 0)),
                pl.BlockSpec((1, D), lambda b, si, h: (0, 0)),
            ],
            out_specs=pl.BlockSpec((None, tq, D), lambda b, si, h: (b, si, 0)),
            scratch_shapes=[pltpu.VMEM((tq, D), jnp.float32)],
        ),
        compiler_params=pltpu.CompilerParams(
            dimension_semantics=("parallel", "parallel", "arbitrary")),
    )(ctx_h, wo_h, bo)


# -----------------------------------------------------------------------------
# Kernel 3a: flash-style attention (no weights output) — fast path.
# K comes pre-transposed as [B, nH, Dh, Sk].
# -----------------------------------------------------------------------------
def _flash_body(q_ref, kt_ref, v_ref, mask_ref, o_ref, m_sc, l_sc, acc_sc):
    kv = pl.program_id(3)

    @pl.when(kv == 0)
    def _():
        m_sc[...] = jnp.full(m_sc.shape, -jnp.inf, dtype=m_sc.dtype)
        l_sc[...] = jnp.zeros(l_sc.shape, dtype=l_sc.dtype)
        acc_sc[...] = jnp.zeros(acc_sc.shape, dtype=acc_sc.dtype)

    # (tq, Dh) x (Dh, tk) plain matmul; f32 accumulation; scale already in Wq.
    s = jnp.dot(q_ref[...], kt_ref[...], preferred_element_type=jnp.float32)
    if mask_ref is not None:
        s = s + mask_ref[...]                          # (tq, tk) + (1, tk)

    m_prev = m_sc[...]
    m_new = jnp.maximum(m_prev, jnp.max(s, axis=-1, keepdims=True))
    alpha = jnp.exp(m_prev - m_new)
    p = jnp.exp(s - m_new)
    l_sc[...] = alpha * l_sc[...] + jnp.sum(p, axis=-1, keepdims=True)
    acc_sc[...] = alpha * acc_sc[...] + jnp.dot(
        p.astype(v_ref.dtype), v_ref[...], preferred_element_type=jnp.float32)
    m_sc[...] = m_new

    @pl.when(kv == pl.num_programs(3) - 1)
    def _():
        o_ref[...] = (acc_sc[...] * pl.reciprocal(l_sc[...], approx=True)
                      ).astype(o_ref.dtype)


def _flash_kernel_masked(q_ref, kt_ref, v_ref, mask_ref, o_ref, m_sc, l_sc, acc_sc):
    _flash_body(q_ref, kt_ref, v_ref, mask_ref, o_ref, m_sc, l_sc, acc_sc)


def _flash_kernel_nomask(q_ref, kt_ref, v_ref, o_ref, m_sc, l_sc, acc_sc):
    _flash_body(q_ref, kt_ref, v_ref, None, o_ref, m_sc, l_sc, acc_sc)


def pallas_mha_flash(qh, kt, vh, add_mask, *, num_heads, q_off=0, k_off=0, v_off=0):
    """qh: [B,Hq,Sq,Dh], kt: [B,Hk,Dh,Sk], vh: [B,Hv,Sk,Dh] -> ctx [B,nH,Sq,Dh].

    Head offsets select this attention's heads inside possibly fused projection
    outputs (e.g. the fused Q+V array).  add_mask is additive f32 [B,1,Sk] or
    None (compile-time no-mask specialization: no mask DMA, no VALU add)."""
    B = qh.shape[0]
    Sq, Dh = qh.shape[2], qh.shape[3]
    Sk = kt.shape[3]
    tq = _pick_tile(Sq, 512, 8)
    tk = _pick_tile(Sk, 1024, 128)
    grid = (B, num_heads, Sq // tq, Sk // tk)

    q_spec = pl.BlockSpec((None, None, tq, Dh),
                          lambda b, h, qi, ki: (b, q_off + h, qi, 0))
    k_spec = pl.BlockSpec((None, None, Dh, tk),
                          lambda b, h, qi, ki: (b, k_off + h, 0, ki))
    v_spec = pl.BlockSpec((None, None, tk, Dh),
                          lambda b, h, qi, ki: (b, v_off + h, ki, 0))
    out_spec = pl.BlockSpec((None, None, tq, Dh),
                            lambda b, h, qi, ki: (b, h, qi, 0))

    if add_mask is not None:
        kernel = _flash_kernel_masked
        in_specs = [q_spec, k_spec, v_spec,
                    pl.BlockSpec((None, 1, tk), lambda b, h, qi, ki: (b, 0, ki))]
        args = (qh, kt, vh, add_mask)
    else:
        kernel = _flash_kernel_nomask
        in_specs = [q_spec, k_spec, v_spec]
        args = (qh, kt, vh)

    return pl.pallas_call(
        kernel,
        out_shape=jax.ShapeDtypeStruct((B, num_heads, Sq, Dh), qh.dtype),
        grid_spec=pltpu.PrefetchScalarGridSpec(
            num_scalar_prefetch=0,
            grid=grid,
            in_specs=in_specs,
            out_specs=out_spec,
            scratch_shapes=[
                pltpu.VMEM((tq, 1), jnp.float32),   # running max
                pltpu.VMEM((tq, 1), jnp.float32),   # running denom
                pltpu.VMEM((tq, Dh), jnp.float32),  # f32 accumulator
            ],
        ),
        compiler_params=pltpu.CompilerParams(
            dimension_semantics=("parallel", "parallel", "parallel", "arbitrary")),
    )(*args)


# -----------------------------------------------------------------------------
# Kernel 3b: attention with head-averaged weights output (return_weights path).
# Sq is tiled so the resident averaged-weights block is (tq, Sk), bounding VMEM
# on v7x; exact reciprocal for the user-visible weights.
# -----------------------------------------------------------------------------
def _weights_body(q_ref, kt_ref, v_ref, mask_ref, o_ref, w_ref, *, inv_heads):
    h = pl.program_id(2)
    s = jnp.dot(q_ref[...], kt_ref[...], preferred_element_type=jnp.float32)
    if mask_ref is not None:
        s = s + mask_ref[...]
    m = jnp.max(s, axis=-1, keepdims=True)
    e = jnp.exp(s - m)
    denom = jnp.sum(e, axis=-1, keepdims=True)
    attn = e / denom                       # exact: returned weights sum to 1
    o_ref[...] = jnp.dot(attn.astype(v_ref.dtype), v_ref[...],
                         preferred_element_type=jnp.float32).astype(o_ref.dtype)

    @pl.when(h == 0)
    def _():
        w_ref[...] = jnp.zeros(w_ref.shape, dtype=w_ref.dtype)
    w_ref[...] += attn * inv_heads


def _weights_kernel_masked(q_ref, kt_ref, v_ref, mask_ref, o_ref, w_ref, *, inv_heads):
    _weights_body(q_ref, kt_ref, v_ref, mask_ref, o_ref, w_ref, inv_heads=inv_heads)


def _weights_kernel_nomask(q_ref, kt_ref, v_ref, o_ref, w_ref, *, inv_heads):
    _weights_body(q_ref, kt_ref, v_ref, None, o_ref, w_ref, inv_heads=inv_heads)


def pallas_mha_weights(qh, kt, vh, add_mask, *, num_heads,
                       q_off=0, k_off=0, v_off=0):
    """-> (ctx [B, nH, Sq, Dh], avg_weights [B, Sq, Sk] f32)."""
    B = qh.shape[0]
    Sq, Dh = qh.shape[2], qh.shape[3]
    Sk = kt.shape[3]
    tq = _pick_tile(Sq, 256, 8)
    grid = (B, Sq // tq, num_heads)

    q_spec = pl.BlockSpec((None, None, tq, Dh),
                          lambda b, si, h: (b, q_off + h, si, 0))
    k_spec = pl.BlockSpec((None, None, Dh, Sk),
                          lambda b, si, h: (b, k_off + h, 0, 0))
    v_spec = pl.BlockSpec((None, None, Sk, Dh),
                          lambda b, si, h: (b, v_off + h, 0, 0))
    out_specs = [
        pl.BlockSpec((None, None, tq, Dh), lambda b, si, h: (b, h, si, 0)),
        pl.BlockSpec((None, tq, Sk), lambda b, si, h: (b, si, 0)),
    ]
    out_shape = (jax.ShapeDtypeStruct((B, num_heads, Sq, Dh), qh.dtype),
                 jax.ShapeDtypeStruct((B, Sq, Sk), jnp.float32))

    if add_mask is not None:
        kernel = partial(_weights_kernel_masked, inv_heads=1.0 / num_heads)
        in_specs = [q_spec, k_spec, v_spec,
                    pl.BlockSpec((None, 1, Sk), lambda b, si, h: (b, 0, 0))]
        args = (qh, kt, vh, add_mask)
    else:
        kernel = partial(_weights_kernel_nomask, inv_heads=1.0 / num_heads)
        in_specs = [q_spec, k_spec, v_spec]
        args = (qh, kt, vh)

    return pl.pallas_call(
        kernel,
        out_shape=out_shape,
        grid_spec=pltpu.PrefetchScalarGridSpec(
            num_scalar_prefetch=0,
            grid=grid,
            in_specs=in_specs,
            out_specs=out_specs,
        ),
        compiler_params=pltpu.CompilerParams(
            dimension_semantics=("parallel", "parallel", "arbitrary")),
    )(*args)


# -----------------------------------------------------------------------------
# Params (PyTorch nn.Linear layout) + one-time prep (head stacks, scale fold,
# fused Q+V stack, K-transposed bias layout).  No per-call concatenation.
# -----------------------------------------------------------------------------
def init_mha_params(key, num_heads, size):
    """Deterministic init mimicking nn.Linear defaults (uniform +-1/sqrt(fan_in))."""
    bound = 1.0 / math.sqrt(size)
    keys = jax.random.split(key, 8)

    def lin(kw, kb):
        w = jax.random.uniform(kw, (size, size), jnp.float32, -bound, bound)
        b = jax.random.uniform(kb, (size,), jnp.float32, -bound, bound)
        return w, b

    wk, bk = lin(keys[0], keys[1])
    wv, bv = lin(keys[2], keys[3])
    wq, bq = lin(keys[4], keys[5])
    wo, bo = lin(keys[6], keys[7])
    return dict(wk=wk, bk=bk, wv=wv, bv=bv, wq=wq, bq=bq, wo=wo, bo=bo)


def prepare_params(raw, num_heads):
    D = raw["wq"].shape[1]
    Dh = D // num_heads
    scale = jnp.float32(1.0 / math.sqrt(Dh))

    def w_heads(w):      # nn.Linear weight [Dout, Din] -> [nH, Din, Dh]
        return jnp.transpose(w.T.reshape(D, num_heads, Dh), (1, 0, 2))

    def b_heads(b):      # [Dout] -> [nH, 1, Dh]
        return b.reshape(num_heads, 1, Dh)

    wq_h = w_heads(raw["wq"]) * scale     # scale folded into Q projection
    bq_h = b_heads(raw["bq"]) * scale
    wk_h = w_heads(raw["wk"])
    bk_h = b_heads(raw["bk"])
    wv_h = w_heads(raw["wv"])
    bv_h = b_heads(raw["bv"])

    return dict(
        num_heads=num_heads, head_size=Dh,
        wq_h=wq_h, bq_h=bq_h,
        wk_h=wk_h, bk_ht=jnp.transpose(bk_h, (0, 2, 1)),   # [nH, Dh, 1]
        wv_h=wv_h, bv_h=bv_h,
        # fused Q+V stack for self-attention (heads 0..nH-1 = Q, nH..2nH-1 = V)
        wqv_h=jnp.concatenate([wq_h, wv_h], axis=0),
        bqv_h=jnp.concatenate([bq_h, bv_h], axis=0),
        # output projection: rows of Wo^T grouped by head -> [nH, Dh, D]
        wo_h=raw["wo"].T.reshape(num_heads, Dh, D),
        bo=raw["bo"].reshape(1, D),
    )


# -----------------------------------------------------------------------------
# Forward pass (matches MultiHeadedAttention.forward, eval mode: dropout = id)
# -----------------------------------------------------------------------------
def multi_headed_attention(prep, k, v, q, mask=None, return_weights=None,
                           *, num_heads):
    """k, v: [B, Sk, D]   q: [B, Sq, D]   mask: optional bool [B, 1, Sk].

    Returns (output [B, Sq, D], avg_weights [B, Sq, Sk] or None)."""
    # ---- projections: kernels write head-major layouts directly (no XLA
    #      transposes anywhere in this forward) ----
    if q is v:
        # self-attention (q is k is v): fuse Q and V into one projection over the
        # shared input -> one x DMA per tile for both.
        qv = pallas_head_proj(q, prep["wqv_h"], prep["bqv_h"])     # [B,2nH,S,Dh]
        qh_arr, q_off = qv, 0
        vh_arr, v_off = qv, num_heads
    else:
        qh_arr = pallas_head_proj(q, prep["wq_h"], prep["bq_h"])   # [B,nH,Sq,Dh]
        vh_arr = pallas_head_proj(v, prep["wv_h"], prep["bv_h"])   # [B,nH,Sk,Dh]
        q_off = v_off = 0
    # K produced pre-transposed: [B, nH, Dh, Sk]
    kt_arr = pallas_head_proj(k, prep["wk_h"], prep["bk_ht"], transpose_out=True)

    # ---- mask (None -> compile-time no-mask kernels, no zeros-mask DMA) ----
    add_mask = None
    if mask is not None:
        # NOTE: fully-masked rows degrade to a softmax over the raw scores
        # (NaN-free) instead of the reference's NaN.
        add_mask = jnp.where(mask, 0.0, MASK_VALUE).astype(jnp.float32)  # [B,1,Sk]

    # ---- attention core ----
    if return_weights:
        ctx, avg_w = pallas_mha_weights(qh_arr, kt_arr, vh_arr, add_mask,
                                        num_heads=num_heads,
                                        q_off=q_off, v_off=v_off)
    else:
        ctx = pallas_mha_flash(qh_arr, kt_arr, vh_arr, add_mask,
                               num_heads=num_heads,
                               q_off=q_off, v_off=v_off)
        avg_w = None
    # TODO(synk): training-mode dropout on attention probs not implemented.

    # ---- output projection directly from head-major ctx ----
    out = pallas_out_proj(ctx, prep["wo_h"], prep["bo"])            # [B, Sq, D]

    if return_weights:
        return out, avg_w
    return out, None


# -----------------------------------------------------------------------------
if __name__ == "__main__":
    B, S, D, NH = 2, 8, 32, 4
    key = jax.random.PRNGKey(0)
    kp_key, kx, kk, kv_, kq = jax.random.split(key, 5)

    raw = init_mha_params(kp_key, NH, D)
    prep = prepare_params(raw, NH)

    lengths = jnp.array([S, S - 3])
    mask = jnp.arange(S)[None, None, :] < lengths[:, None, None]     # [B,1,S] bool

    # pure-JAX reference of the PyTorch forward
    def ref(k, v, q, mask):
        Dh = D // NH
        kp = k @ raw["wk"].T + raw["bk"]
        vp = v @ raw["wv"].T + raw["bv"]
        qp = q @ raw["wq"].T + raw["bq"]
        kh = kp.reshape(B, S, NH, Dh).transpose(0, 2, 1, 3)
        vh = vp.reshape(B, S, NH, Dh).transpose(0, 2, 1, 3)
        qh = qp.reshape(B, S, NH, Dh).transpose(0, 2, 1, 3) / math.sqrt(Dh)
        sc = jnp.einsum("bhqd,bhkd->bhqk", qh, kh)
        if mask is not None:
            sc = jnp.where(mask[:, None, :, :], sc, -jnp.inf)
        w = jax.nn.softmax(sc, axis=-1)
        ctx = jnp.einsum("bhqk,bhkd->bhqd", w, vh)
        ctx = ctx.transpose(0, 2, 1, 3).reshape(B, S, D)
        return ctx @ raw["wo"].T + raw["bo"], w.sum(axis=1) / NH

    # Case 1: self-attention (fused Q+V projection) + mask + weights output
    x = jax.random.normal(kx, (B, S, D), jnp.float32)
    out1, w1 = multi_headed_attention(prep, x, x, x, mask=mask,
                                      return_weights=True, num_heads=NH)
    out1 = jax.block_until_ready(out1)
    w1 = jax.block_until_ready(w1)
    ro1, rw1 = ref(x, x, x, mask)
    assert jnp.allclose(out1, ro1, atol=2e-3, rtol=2e-3)
    assert jnp.allclose(w1, rw1, atol=2e-3, rtol=2e-3)

    # Case 2: distinct k/v/q (separate projections) + mask, flash fast path
    k_in = jax.random.normal(kk, (B, S, D), jnp.float32)
    v_in = jax.random.normal(kv_, (B, S, D), jnp.float32)
    q_in = jax.random.normal(kq, (B, S, D), jnp.float32)
    out2, w2 = multi_headed_attention(prep, k_in, v_in, q_in, mask=mask,
                                      return_weights=False, num_heads=NH)
    out2 = jax.block_until_ready(out2)
    ro2, _ = ref(k_in, v_in, q_in, mask)
    assert w2 is None
    assert jnp.allclose(out2, ro2, atol=2e-3, rtol=2e-3)

    # Case 3: shared k/v buffer, distinct q, no mask (no-mask flash kernel)
    out3, _ = multi_headed_attention(prep, k_in, k_in, q_in, mask=None,
                                     return_weights=False, num_heads=NH)
    out3 = jax.block_until_ready(out3)
    ro3, _ = ref(k_in, k_in, q_in, None)
    assert jnp.allclose(out3, ro3, atol=2e-3, rtol=2e-3)

    print("KERNEL_OK")
</pallas_src>

<mosaic_0001>
module attributes {stable_mosaic.version = 11 : i64} {
  func.func @_proj_heads_kernel(%arg0: i32, %arg1: i32, %arg2: i32, %arg3: memref<1x8x32xf32, #tpu.memory_space<vmem>>, %arg4: memref<1x32x8xf32, #tpu.memory_space<vmem>>, %arg5: memref<1x1x8xf32, #tpu.memory_space<vmem>>, %arg6: memref<1x1x8x8xf32, #tpu.memory_space<vmem>>) attributes {dimension_semantics = [#tpu.dimension_semantics<parallel>, #tpu.dimension_semantics<parallel>, #tpu.dimension_semantics<parallel>], iteration_bounds = array<i64: 2, 1, 8>, scalar_prefetch = 0 : i64, scratch_operands = 0 : i64, tpu.core_type = #tpu.core_type<tc>, window_params = [{transform_indices = @transform_0, window_bounds = array<i64: 1, 8, 32>}, {transform_indices = @transform_1, window_bounds = array<i64: 1, 32, 8>}, {transform_indices = @transform_2, window_bounds = array<i64: 1, 1, 8>}, {transform_indices = @transform_3, window_bounds = array<i64: 1, 1, 8, 8>}]} {
    %c0 = arith.constant 0 : index
    %c0_0 = arith.constant 0 : index
    %c0_1 = arith.constant 0 : index
    %0 = vector.load %arg3[%c0, %c0_0, %c0_1] : memref<1x8x32xf32, #tpu.memory_space<vmem>>, vector<1x8x32xf32>
    %1 = vector.shape_cast %0 : vector<1x8x32xf32> to vector<8x32xf32>
    %c0_2 = arith.constant 0 : index
    %c0_3 = arith.constant 0 : index
    %c0_4 = arith.constant 0 : index
    %2 = vector.load %arg4[%c0_2, %c0_3, %c0_4] : memref<1x32x8xf32, #tpu.memory_space<vmem>>, vector<1x32x8xf32>
    %3 = vector.shape_cast %2 : vector<1x32x8xf32> to vector<32x8xf32>
    %cst = arith.constant dense<0.000000e+00> : vector<8x8xf32>
    %4 = tpu.matmul %1, %3, %cst {dimension_numbers = #tpu.dot_dimension_numbers<[1], [0], [0], [1], [0, 0, 1, 1], [], []>} : vector<8x32xf32>, vector<32x8xf32>, vector<8x8xf32> -> vector<8x8xf32>
    %c0_5 = arith.constant 0 : index
    %c0_6 = arith.constant 0 : index
    %c0_7 = arith.constant 0 : index
    %5 = vector.load %arg5[%c0_5, %c0_6, %c0_7] : memref<1x1x8xf32, #tpu.memory_space<vmem>>, vector<1x1x8xf32>
    %6 = vector.shape_cast %5 : vector<1x1x8xf32> to vector<1x8xf32>
    %7 = vector.broadcast %6 : vector<1x8xf32> to vector<8x8xf32>
    %8 = arith.addf %4, %7 : vector<8x8xf32>
    %c0_8 = arith.constant 0 : index
    %c0_9 = arith.constant 0 : index
    %c0_10 = arith.constant 0 : index
    %c0_11 = arith.constant 0 : index
    %9 = vector.load %arg6[%c0_8, %c0_9, %c0_10, %c0_11] : memref<1x1x8x8xf32, #tpu.memory_space<vmem>>, vector<1x1x8x8xf32>
    %10 = vector.shape_cast %9 : vector<1x1x8x8xf32> to vector<8x8xf32>
    %11 = vector.shape_cast %8 : vector<8x8xf32> to vector<1x1x8x8xf32>
    tpu.vector_store %arg6[%c0_8, %c0_9, %c0_10, %c0_11], %11 {strides = array<i32>} : memref<1x1x8x8xf32, #tpu.memory_space<vmem>>, vector<1x1x8x8xf32>,
    return
  }
  func.func @transform_0(%arg0: i32, %arg1: i32, %arg2: i32) -> (i32, i32, i32) {
    %c0_i32 = arith.constant 0 : i32
    %c0_i32_0 = arith.constant 0 : i32
    return %arg0, %arg1, %c0_i32 : i32, i32, i32
  }
  func.func @transform_1(%arg0: i32, %arg1: i32, %arg2: i32) -> (i32, i32, i32) {
    %c0_i32 = arith.constant 0 : i32
    %c0_i32_0 = arith.constant 0 : i32
    %c0_i32_1 = arith.constant 0 : i32
    return %arg2, %c0_i32, %c0_i32_0 : i32, i32, i32
  }
  func.func @transform_2(%arg0: i32, %arg1: i32, %arg2: i32) -> (i32, i32, i32) {
    %c0_i32 = arith.constant 0 : i32
    %c0_i32_0 = arith.constant 0 : i32
    %c0_i32_1 = arith.constant 0 : i32
    return %arg2, %c0_i32, %c0_i32_0 : i32, i32, i32
  }
  func.func @transform_3(%arg0: i32, %arg1: i32, %arg2: i32) -> (i32, i32, i32, i32) {
    %c0_i32 = arith.constant 0 : i32
    %c0_i32_0 = arith.constant 0 : i32
    return %arg0, %arg2, %arg1, %c0_i32 : i32, i32, i32, i32
  }
}

</mosaic_0001>

<llo_original>
// kernel: tpu_custom_call.1
$region0: #{tpu_custom_call.1}
  #allocation0 [shape = 'u32[]', space=smem, size = 0x4, offset = 0x4, fixed_abs, tag = 'smem constant byte address 0x4 - core index']
  #allocation1 [shape = 'u32[72,128]{1,0:T(1,128)}', space=vmem, size = 0x9000, scoped, tag = 'internal scratch']
  %s0 = inlined_call_operand.vmem [shape: f32[2,8,32], index: 0, kind: input, shape index: {}]
  %s1 = inlined_call_operand.vmem [shape: f32[8,32,8], index: 1, kind: input, shape index: {}]
  %s2 = inlined_call_operand.vmem [shape: f32[8,1,8], index: 2, kind: input, shape index: {}]
  %s3 = inlined_call_operand.hbm [shape: f32[2,8,8,8], index: 3, kind: output, shape index: {}]
  %s4 = sld [smem:[#allocation0]]
  $region45: #{tpu_custom_call.1} parent=0
    _
  %s6 = ssub.s32 1, %s4
  %s7 = scalar_select 0, %s6, %s4
  $region1: #{tpu_custom_call.1} parent=0
    #allocation2 [shape = 'u8[8192]{0}', space=vmem, size = 0x2000, scoped, tag = 'output window, operand 0']
    #allocation3 [shape = 's32[2]{0}', space=sflag, size = 0x8, scoped, tag = 'scoped memory for tpu_custom_call.1']
    %8 = vsyncpa [#allocation3], 0
    %s9 = scalar_lea.sflag [#allocation3], 1
    %10 = vsyncpa %s9, 0
    loop: start=0, step=1, limit=18
    $region2: #{tpu_custom_call.1} parent=1 // loop_pre_header
      _
    $region3: #{tpu_custom_call.1} parent=1 // loop_header
      %s12 = sphi 0, %s16
      %p13 = scmp.ge.s32.totalorder %s12, 18
      %s19 = sphi 0, %s38
      %s20 = sphi 0, %s34
      %s21 = sphi 0, %s30
      %s22 = sphi 0, %s19
      %s23 = sphi 0, %s20
      %s24 = sphi 0, %s21
      %s25 = sphi 0, %s22
      %s26 = sphi 0, %s23
      %s27 = sphi 0, %s24
      %s43 = sphi 0, %s45
      %s46 = sphi 0, %s43
      %s47 = sphi 0, %s46
      %s63 = sphi 0, %s47
      %s69 = sphi 0, %s71
      %s72 = sphi 0, %s69
      %s73 = sphi 0, %s72
      %s89 = sphi 0, %s73
      %s95 = sphi 0, %s97
      %s98 = sphi 0, %s95
      %s99 = sphi 0, %s98
      %s115 = sphi 0, %s99
      %s125 = sphi 0, %s127
      %s128 = sphi 0, %s125
      %s129 = sphi 0, %s128
      %s145 = sphi 0, %s129
    $region4: #{tpu_custom_call.1} parent=1 // loop_header_branch
      %15 = sbr.rel (%p13) target = $region8
    $region5: #{tpu_custom_call.1} parent=1 // loop_body
      %s17 = ssub.s32 %s12, 1
      %s18 = ssub.s32 %s12, 2
      %s28 = sadd.s32 1, %s21
      %p29 = scmp.ge.s32.totalorder %s28, 8
      %s30 = scalar_select %p29, 0, %s28
      %s31 = sadd.s32 1, %s20
      %s32 = scalar_select %p29, %s31, %s20
      %p33 = scmp.ge.s32.totalorder %s32, 1
      %s34 = scalar_select %p33, 0, %s32
      %s35 = sadd.s32 1, %s19
      %s36 = scalar_select %p33, %s35, %s19
      %p37 = scmp.ge.s32.totalorder %s36, 2
      %s38 = scalar_select %p37, 0, %s36
      %s39 = ssub.s32 %s19, %s38
      %s40 = ssub.s32 %s20, %s34
      %s41 = sor.u32 %s39, %s40
      %p42 = scmp.eq.s32.totalorder %s41, 0
      %s44 = sadd.s32 %s43, 1
      %s45 = scalar_select %p42, %s43, %s44
      %p48 = pneg %p42
      %p49 = scmp.eq.s32.totalorder %s12, 15
      %p50 = por %p48, %p49
      %p51 = scmp.ne.s32.totalorder %s43, %s46
      %p52 = scmp.eq.s32.totalorder %s12, 0
      %p53 = por %p51, %p52
      %p54 = scmp.ne.s32.totalorder %s43, %s46
      %p55 = scmp.eq.s32.totalorder %s17, 15
      %p56 = por %p54, %p55
      %p57 = scmp.ne.s32.totalorder %s46, %s47
      %p58 = scmp.eq.s32.totalorder %s17, 0
      %p59 = por %p57, %p58
      %p60 = scmp.ne.s32.totalorder %s46, %s47
      %p61 = scmp.eq.s32.totalorder %s18, 15
      %p62 = por %p60, %p61
      %p64 = scmp.ne.s32.totalorder %s47, %s63
      %p65 = scmp.eq.s32.totalorder %s18, 0
      %p66 = por %p64, %p65
      %s67 = ssub.s32 %s21, %s30
      %p68 = scmp.eq.s32.totalorder %s67, 0
      %s70 = sadd.s32 %s69, 1
      %s71 = scalar_select %p68, %s69, %s70
      %p74 = pneg %p68
      %p75 = scmp.eq.s32.totalorder %s12, 15
      %p76 = por %p74, %p75
      %p77 = scmp.ne.s32.totalorder %s69, %s72
      %p78 = scmp.eq.s32.totalorder %s12, 0
      %p79 = por %p77, %p78
      %p80 = scmp.ne.s32.totalorder %s69, %s72
      %p81 = scmp.eq.s32.totalorder %s17, 15
      %p82 = por %p80, %p81
      %p83 = scmp.ne.s32.totalorder %s72, %s73
      %p84 = scmp.eq.s32.totalorder %s17, 0
      %p85 = por %p83, %p84
      %p86 = scmp.ne.s32.totalorder %s72, %s73
      %p87 = scmp.eq.s32.totalorder %s18, 15
      %p88 = por %p86, %p87
      %p90 = scmp.ne.s32.totalorder %s73, %s89
      %p91 = scmp.eq.s32.totalorder %s18, 0
      %p92 = por %p90, %p91
      %s93 = ssub.s32 %s21, %s30
      %p94 = scmp.eq.s32.totalorder %s93, 0
      %s96 = sadd.s32 %s95, 1
      %s97 = scalar_select %p94, %s95, %s96
      %p100 = pneg %p94
      %p101 = scmp.eq.s32.totalorder %s12, 15
      %p102 = por %p100, %p101
      %p103 = scmp.ne.s32.totalorder %s95, %s98
      %p104 = scmp.eq.s32.totalorder %s12, 0
      %p105 = por %p103, %p104
      %p106 = scmp.ne.s32.totalorder %s95, %s98
      %p107 = scmp.eq.s32.totalorder %s17, 15
      %p108 = por %p106, %p107
      %p109 = scmp.ne.s32.totalorder %s98, %s99
      %p110 = scmp.eq.s32.totalorder %s17, 0
      %p111 = por %p109, %p110
      %p112 = scmp.ne.s32.totalorder %s98, %s99
      %p113 = scmp.eq.s32.totalorder %s18, 15
      %p114 = por %p112, %p113
      %p116 = scmp.ne.s32.totalorder %s99, %s115
      %p117 = scmp.eq.s32.totalorder %s18, 0
      %p118 = por %p116, %p117
      %s119 = ssub.s32 %s19, %s38
      %s120 = ssub.s32 %s21, %s30
      %s121 = sor.u32 %s119, %s120
      %s122 = ssub.s32 %s20, %s34
      %s123 = sor.u32 %s121, %s122
      %p124 = scmp.eq.s32.totalorder %s123, 0
      %s126 = sadd.s32 %s125, 1
      %s127 = scalar_select %p124, %s125, %s126
      %p130 = pneg %p124
      %p131 = scmp.eq.s32.totalorder %s12, 15
      %p132 = por %p130, %p131
      %p133 = scmp.ne.s32.totalorder %s125, %s128
      %p134 = scmp.eq.s32.totalorder %s12, 0
      %p135 = por %p133, %p134
      %p136 = scmp.ne.s32.totalorder %s125, %s128
      %p137 = scmp.eq.s32.totalorder %s17, 15
      %p138 = por %p136, %p137
      %p139 = scmp.ne.s32.totalorder %s128, %s129
      %p140 = scmp.eq.s32.totalorder %s17, 0
      %p141 = por %p139, %p140
      %p142 = scmp.ne.s32.totalorder %s128, %s129
      %p143 = scmp.eq.s32.totalorder %s18, 15
      %p144 = por %p142, %p143
      %p146 = scmp.ne.s32.totalorder %s129, %s145
      %p147 = scmp.eq.s32.totalorder %s18, 0
      %p148 = por %p146, %p147
      %p149 = scmp.le.s32.totalorder 1, %s12
      %p150 = scmp.lt.s32.totalorder %s12, 17
      %p151 = pnand %p149, %p150
      %p152 = pneg %p151
      // Predicated region
      $region9: #{tpu_custom_call.1} parent=5 // pred_check
        _
      $region10: #{tpu_custom_call.1} parent=5 // pred_check_branch
        %154 = sbr.rel (%p151) target = $region12
      $region11: #{tpu_custom_call.1} parent=5 // pred_region
        %s155 = ssub.s32 %s12, 1
      $region12: #{tpu_custom_call.1} parent=5 // pred_fallthru
        _
      %p156 = scmp.lt.s32.totalorder %s12, 16
      // Predicated region
      $region13: #{tpu_custom_call.1} parent=5 // pred_check
        %p157 = pneg %p156
      $region14: #{tpu_custom_call.1} parent=5 // pred_check_branch
        %159 = sbr.rel (%p157) target = $region16
      $region15: #{tpu_custom_call.1} parent=5 // pred_region
        // Predicated region
        $region17: #{tpu_custom_call.1} parent=15 // pred_check
          %p160 = pneg %p53
        $region18: #{tpu_custom_call.1} parent=15 // pred_check_branch
          %162 = sbr.rel (%p160) target = $region20
        $region19: #{tpu_custom_call.1} parent=15 // pred_region
          %p163 = scmp.lt.s32.totalorder %s19, 1
          %s164 = scalar_select %p163, %s19, 1
          %p165 = scmp.lt.s32.totalorder %s20, 0
          %s166 = scalar_select %p165, %s20, 0
          %s167 = sadd.s32 %s166, %s164
          %s168 = smul.addr %s167, 8
          %s169 = scalar_lea.vmem %s0, %s168
        $region20: #{tpu_custom_call.1} parent=15 // pred_fallthru
          _
        // Predicated region
        $region21: #{tpu_custom_call.1} parent=15 // pred_check
          %p170 = pneg %p79
        $region22: #{tpu_custom_call.1} parent=15 // pred_check_branch
          %172 = sbr.rel (%p170) target = $region24
        $region23: #{tpu_custom_call.1} parent=15 // pred_region
          %p173 = scmp.lt.s32.totalorder %s21, 7
          %s174 = scalar_select %p173, %s21, 7
          %s175 = smul.addr %s174, 4
          %s176 = smul.addr %s175, 8
          %s177 = scalar_lea.vmem %s1, %s176
        $region24: #{tpu_custom_call.1} parent=15 // pred_fallthru
          _
        // Predicated region
        $region25: #{tpu_custom_call.1} parent=15 // pred_check
          %p178 = pneg %p105
        $region26: #{tpu_custom_call.1} parent=15 // pred_check_branch
          %180 = sbr.rel (%p178) target = $region28
        $region27: #{tpu_custom_call.1} parent=15 // pred_region
          %p181 = scmp.lt.s32.totalorder %s21, 7
          %s182 = scalar_select %p181, %s21, 7
          %s183 = scalar_lea.vmem %s2, %s182
        $region28: #{tpu_custom_call.1} parent=15 // pred_fallthru
          _
      $region16: #{tpu_custom_call.1} parent=5 // pred_fallthru
        _
      %p184 = scmp.le.s32.totalorder 1, %s12
      %p185 = scmp.lt.s32.totalorder %s12, 17
      %p186 = pnand %p184, %p185
      %p187 = pneg %p186
      // Predicated region
      $region29: #{tpu_custom_call.1} parent=5 // pred_check
        _
      $region30: #{tpu_custom_call.1} parent=5 // pred_check_branch
        %189 = sbr.rel (%p186) target = $region32
      $region31: #{tpu_custom_call.1} parent=5 // pred_region
        %s190 = ssub.s32 %s12, 1
        %p191 = scmp.lt.s32.totalorder %s22, 1
        %s192 = scalar_select %p191, %s22, 1
        %p193 = scmp.lt.s32.totalorder %s23, 0
        %s194 = scalar_select %p193, %s23, 0
        %s195 = sadd.s32 %s194, %s192
        %s196 = smul.addr %s195, 8
        %s197 = scalar_lea.vmem %s0, %s196
        %p198 = pneg %p59
        %p199 = pneg %p56
        %p200 = scmp.lt.s32.totalorder %s24, 7
        %s201 = scalar_select %p200, %s24, 7
        %s202 = smul.addr %s201, 4
        %s203 = smul.addr %s202, 8
        %s204 = scalar_lea.vmem %s1, %s203
        %p205 = pneg %p85
        %p206 = pneg %p82
        %p207 = scmp.lt.s32.totalorder %s24, 7
        %s208 = scalar_select %p207, %s24, 7
        %s209 = scalar_lea.vmem %s2, %s208
        %p210 = pneg %p111
        %p211 = pneg %p108
        %p212 = pneg %p141
        %p213 = pneg %p138
        %s214 = sand.u32 %s128, 1
        %s215 = scalar_lea.sflag [#allocation3], %s214
        %s216 = sand.u32 %s128, 1
        %s217 = smul.addr %s216, 8
        %s218 = scalar_lea.vmem [#allocation2], %s217
        %p219 = scmp.lt.s32.totalorder %s22, 1
        %s220 = scalar_select %p219, %s22, 1
        %p221 = scmp.lt.s32.totalorder %s23, 0
        %s222 = scalar_select %p221, %s23, 0
        %s223 = sadd.s32 %s222, %s220
        %s224 = smul.addr %s223, 8
        %s225 = scalar_lea.vmem %s0, %s224
        %p226 = scmp.lt.s32.totalorder %s24, 7
        %s227 = scalar_select %p226, %s24, 7
        %s228 = smul.addr %s227, 4
        %s229 = smul.addr %s228, 8
        %s230 = scalar_lea.vmem %s1, %s229
        %p231 = scmp.lt.s32.totalorder %s24, 7
        %s232 = scalar_select %p231, %s24, 7
        %s233 = scalar_lea.vmem %s2, %s232
        %v234 = vld [vmem:[%s225] sm:$0xff]
        %v235 = vld [vmem:[%s230] sm:$0xff]
        %v236 = vld [vmem:[%s230 + $0x8] sm:$0xff]
        %v237 = vld [vmem:[%s230 + $0x10] sm:$0xff]
        %v238 = vld [vmem:[%s230 + $0x18] sm:$0xff]
        %v239 = vld [vmem:[%s233] sm:$0x1]
        %v241 = vperm.slane %v239, 0
        %vm243 = vcmask 261120
        %v245 = vsel %vm243, %v234, 0
        %247 = vmatpush.msra.mxu0 0.0
        %248 = vmatpush.msra.mxu0 0.0
        %249 = vmatpush.msra.mxu0 0.0
        %250 = vmatpush.msra.mxu0 0.0
        %251 = vmatpush.msra.mxu0 0.0
        %252 = vmatpush.msra.mxu0 0.0
        %253 = vmatpush.msra.mxu0 0.0
        %254 = vmatpush.msra.mxu0 0.0
        %255 = vmatpush.msra.mxu0 0.0
        %256 = vmatpush.msra.mxu0 0.0
        %257 = vmatpush.msra.mxu0 0.0
        %258 = vmatpush.msra.mxu0 0.0
        %259 = vmatpush.msra.mxu0 %v238
        %260 = vmatpush.msra.mxu0 %v237
        %261 = vmatpush.msra.mxu0 %v236
        %262 = vmatpush.msra.mxu0 %v235
        %263 = vmatmul.f32.gmra.mxu0 %v245
        %v264 = vpop.f32.mrf.mxu0
        %v265 = vadd.f32 %v241, %v264
        %266 = vdwg.mxu0
        %vm267 = vcmask 64512
        %268 = vst.msk [vmem:[%s218] sm:$0xff] %vm267, %v265
        %s269 = sand.u32 %s128, 1
        %s270 = scalar_lea.sflag [#allocation3], %s269
        %s271 = sand.u32 %s128, 1
        %s272 = smul.addr %s271, 8
        %s273 = scalar_lea.vmem [#allocation2], %s272
        // Predicated region
        $region33: #{tpu_custom_call.1} parent=31 // pred_check
          %p274 = pneg %p138
        $region34: #{tpu_custom_call.1} parent=31 // pred_check_branch
          %276 = sbr.rel (%p274) target = $region36
        $region35: #{tpu_custom_call.1} parent=31 // pred_region
          %278 = vsyncadd %s270, 0
          %s279 = sadd.s32 %s23, %s24
          %s280 = smul.addr %s22, 8
          %s281 = sadd.s32 %s279, %s280
          %s282 = smul.addr %s281, 8
          %s283 = scalar_lea.hbm %s3, %s282
          %s285 = sshll.u32 %s273, 4
          %s286 = int_to_ptr.vmem [resolvable:$true] %s285
          %s287 = sshll.u32 %s283, 4
          %s288 = int_to_ptr.hbm [resolvable:$true] %s287
          %290 = dma.vmem_to_hbm [thread:$0]  %s286, 128, %s288, %s270
        $region36: #{tpu_custom_call.1} parent=31 // pred_fallthru
          _
      $region32: #{tpu_custom_call.1} parent=5 // pred_fallthru
        _
      %p291 = scmp.le.s32.totalorder 2, %s12
      // Predicated region
      $region37: #{tpu_custom_call.1} parent=5 // pred_check
        %p292 = pneg %p291
      $region38: #{tpu_custom_call.1} parent=5 // pred_check_branch
        %294 = sbr.rel (%p292) target = $region40
      $region39: #{tpu_custom_call.1} parent=5 // pred_region
        %s295 = ssub.s32 %s12, 2
        // Predicated region
        $region41: #{tpu_custom_call.1} parent=39 // pred_check
          %p296 = pneg %p144
        $region42: #{tpu_custom_call.1} parent=39 // pred_check_branch
          %298 = sbr.rel (%p296) target = $region44
        $region43: #{tpu_custom_call.1} parent=39 // pred_region
          %s299 = sand.u32 %s129, 1
          %s300 = scalar_lea.sflag [#allocation3], %s299
          %s301 = sand.u32 %s129, 1
          %s302 = smul.addr %s301, 8
          %s303 = scalar_lea.vmem [#allocation2], %s302
          %305 = dma.done %s300, 128
        $region44: #{tpu_custom_call.1} parent=39 // pred_fallthru
          _
      $region40: #{tpu_custom_call.1} parent=5 // pred_fallthru
        _
    $region6: #{tpu_custom_call.1} parent=1 // loop_footer
      %s16 = sadd.s32 1, %s12
    $region7: #{tpu_custom_call.1} parent=1 // loop_footer_branch
      %11 = sbr.rel target = $region3
    $region8: #{tpu_custom_call.1} parent=1 // loop_exit
      _
    %306 = vsyncpa [#allocation3], 1
    %s307 = scalar_lea.sflag [#allocation3], 1
    %308 = vsyncpa %s307, 1

</llo_original>
